<compile_context>
chip_gen: v5e
topology: v5e:2x2
jax: 0.10.0
libtpu: 0.0.40
codegen_flags: <defaults>
</compile_context>

<pallas_src>
import jax
import jax.numpy as jnp
from jax.experimental import pallas as pl
from jax.experimental.pallas import tpu as pltpu

LANE = 128       # TPU lane width (last dim)
SUBLANE = 8      # TPU sublane width (second-to-last dim)
MAX_TILE_B = 1024
NEG = jnp.float32(-1e30)   # bias fill for padded action lanes (never argmax winner)


def _round_up(n, m):
    return ((n + m - 1) // m) * m


def _pad2(a, rows, cols, fill=0.0):
    r, c = a.shape
    return jnp.pad(a, ((0, rows - r), (0, cols - c)), constant_values=fill)


def _mlp_argmax_kernel(x_ref, w1_ref, b1_ref, w2_ref, b2_ref, q_ref, a_ref):
    # Hidden layer: MXU matmul (f32 accumulate) + VPU bias/ReLU.
    h = jnp.dot(x_ref[...], w1_ref[...], preferred_element_type=jnp.float32)
    h = jnp.maximum(h + b1_ref[...], 0.0)          # b1: (1, HID_P) broadcast
    # Output layer: Q-values for every (padded) action.
    q = jnp.dot(h, w2_ref[...], preferred_element_type=jnp.float32)
    q = q + b2_ref[...]                            # padded lanes get NEG bias
    q_ref[...] = q.astype(q_ref.dtype)

    # Fused greedy-action selection (first-occurrence argmax, like torch).
    idx = jax.lax.broadcasted_iota(jnp.int32, q.shape, 1)
    q_max = jnp.max(q, axis=-1, keepdims=True)
    first_max = jnp.min(
        jnp.where(q == q_max, idx, jnp.int32(q.shape[-1])),
        axis=-1, keepdims=True)
    a_ref[...] = first_max.astype(jnp.int32)


def init_padded_params(key, obs_dim, hidden_dim, act_dim):
    """nn.Linear-style U(-1/sqrt(fan_in), 1/sqrt(fan_in)) init, then pad feature
    dims to lane width. Returns (unpadded params, padded params)."""
    k1, k2, k3, k4 = jax.random.split(key, 4)
    lim1 = 1.0 / jnp.sqrt(obs_dim)
    lim2 = 1.0 / jnp.sqrt(hidden_dim)
    w1 = jax.random.uniform(k1, (obs_dim, hidden_dim), jnp.float32, -lim1, lim1)
    b1 = jax.random.uniform(k2, (1, hidden_dim), jnp.float32, -lim1, lim1)
    w2 = jax.random.uniform(k3, (hidden_dim, act_dim), jnp.float32, -lim2, lim2)
    b2 = jax.random.uniform(k4, (1, act_dim), jnp.float32, -lim2, lim2)

    obs_p = _round_up(obs_dim, LANE)
    hid_p = _round_up(hidden_dim, LANE)
    act_p = _round_up(act_dim, LANE)
    w1_p = _pad2(w1, obs_p, hid_p)
    b1_p = _pad2(b1, 1, hid_p)
    w2_p = _pad2(w2, hid_p, act_p)
    b2_p = _pad2(b2, 1, act_p, fill=NEG)   # padded action lanes -> -1e30
    return (w1, b1, w2, b2), (w1_p, b1_p, w2_p, b2_p)


def sarsa_forward(x, padded_params, act_dim):
    """Q = relu(x @ W1 + b1) @ W2 + b2 and greedy action = argmax(Q, -1).

    x: [batch, obs_dim] float32 (unpadded). Returns (Q [batch, act_dim] f32,
    actions [batch] int32). All matmuls run lane-dense on padded shapes; a
    batch grid pipelines X/Q DMAs and shards across TensorCores on v7x.
    """
    w1_p, b1_p, w2_p, b2_p = padded_params
    batch, obs_dim = x.shape
    obs_p, hid_p = w1_p.shape
    act_p = w2_p.shape[1]

    tile_b = min(MAX_TILE_B, _round_up(batch, SUBLANE))
    b_pad = _round_up(batch, tile_b)
    x_p = _pad2(x, b_pad, obs_p)
    grid = (b_pad // tile_b,)

    flops = 2 * b_pad * (obs_p * hid_p + hid_p * act_p)
    bytes_accessed = 4 * (x_p.size + w1_p.size + b1_p.size + w2_p.size +
                          b2_p.size + b_pad * act_p + b_pad)

    q_p, actions_p = pl.pallas_call(
        _mlp_argmax_kernel,
        out_shape=(
            jax.ShapeDtypeStruct((b_pad, act_p), jnp.float32),
            jax.ShapeDtypeStruct((b_pad, 1), jnp.int32),
        ),
        grid=grid,
        in_specs=[
            pl.BlockSpec((tile_b, obs_p), lambda i: (i, 0)),   # X tile
            pl.BlockSpec((obs_p, hid_p), lambda i: (0, 0)),    # W1 (resident)
            pl.BlockSpec((1, hid_p), lambda i: (0, 0)),        # b1
            pl.BlockSpec((hid_p, act_p), lambda i: (0, 0)),    # W2 (resident)
            pl.BlockSpec((1, act_p), lambda i: (0, 0)),        # b2
        ],
        out_specs=(
            pl.BlockSpec((tile_b, act_p), lambda i: (i, 0)),   # Q tile (lane-dense)
            pl.BlockSpec((tile_b, 1), lambda i: (i, 0)),       # greedy actions
        ),
        compiler_params=pltpu.CompilerParams(
            dimension_semantics=("parallel",)),                # v7x: 2 TCs
        cost_estimate=pl.CostEstimate(
            flops=flops, transcendentals=0, bytes_accessed=bytes_accessed),
    )(x_p, w1_p, b1_p, w2_p, b2_p)

    return q_p[:batch, :act_dim], actions_p[:batch, 0]


if __name__ == "__main__":
    # Small shapes consistent with the module: obs_dim=16, hidden_sizes=[64], act_dim=4
    batch, obs_dim, hidden_dim, act_dim = 8, 16, 64, 4

    key = jax.random.PRNGKey(0)
    kx, kp = jax.random.split(key)
    x = jax.random.normal(kx, (batch, obs_dim), dtype=jnp.float32)
    (w1, b1, w2, b2), padded = init_padded_params(kp, obs_dim, hidden_dim, act_dim)

    q_vals, actions = sarsa_forward(x, padded, act_dim)
    jax.block_until_ready((q_vals, actions))

    # Pure-JAX reference check (unpadded params)
    ref_q = jnp.maximum(x @ w1 + b1, 0.0) @ w2 + b2
    ref_a = jnp.argmax(ref_q, axis=-1).astype(jnp.int32)

    assert q_vals.shape == (batch, act_dim)
    assert actions.shape == (batch,)
    assert jnp.allclose(q_vals, ref_q, atol=1e-4, rtol=1e-4), "Q mismatch"
    assert jnp.array_equal(actions, ref_a), "argmax action mismatch"

    print("KERNEL_OK")
</pallas_src>

<mosaic_0001>
module attributes {stable_mosaic.version = 11 : i64} {
  func.func @_mlp_argmax_kernel(%arg0: i32, %arg1: memref<8x128xf32, #tpu.memory_space<vmem>>, %arg2: memref<128x128xf32, #tpu.memory_space<vmem>>, %arg3: memref<1x128xf32, #tpu.memory_space<vmem>>, %arg4: memref<128x128xf32, #tpu.memory_space<vmem>>, %arg5: memref<1x128xf32, #tpu.memory_space<vmem>>, %arg6: memref<8x128xf32, #tpu.memory_space<vmem>>, %arg7: memref<8x1xi32, #tpu.memory_space<vmem>>) attributes {dimension_semantics = [#tpu.dimension_semantics<parallel>], iteration_bounds = array<i64: 1>, scalar_prefetch = 0 : i64, scratch_operands = 0 : i64, tpu.core_type = #tpu.core_type<tc>, window_params = [{transform_indices = @transform_0, window_bounds = array<i64: 8, 128>}, {pipeline_mode = #tpu.pipeline_mode<synchronous>, transform_indices = @transform_1, window_bounds = array<i64: 128, 128>}, {pipeline_mode = #tpu.pipeline_mode<synchronous>, transform_indices = @transform_2, window_bounds = array<i64: 1, 128>}, {pipeline_mode = #tpu.pipeline_mode<synchronous>, transform_indices = @transform_3, window_bounds = array<i64: 128, 128>}, {pipeline_mode = #tpu.pipeline_mode<synchronous>, transform_indices = @transform_4, window_bounds = array<i64: 1, 128>}, {transform_indices = @transform_5, window_bounds = array<i64: 8, 128>}, {transform_indices = @transform_6, window_bounds = array<i64: 8, 1>}]} {
    %c0 = arith.constant 0 : index
    %c0_0 = arith.constant 0 : index
    %0 = vector.load %arg1[%c0, %c0_0] : memref<8x128xf32, #tpu.memory_space<vmem>>, vector<8x128xf32>
    %c0_1 = arith.constant 0 : index
    %c0_2 = arith.constant 0 : index
    %1 = vector.load %arg2[%c0_1, %c0_2] : memref<128x128xf32, #tpu.memory_space<vmem>>, vector<128x128xf32>
    %cst = arith.constant dense<0.000000e+00> : vector<8x128xf32>
    %2 = tpu.matmul %0, %1, %cst {dimension_numbers = #tpu.dot_dimension_numbers<[1], [0], [0], [1], [0, 0, 1, 1], [], []>} : vector<8x128xf32>, vector<128x128xf32>, vector<8x128xf32> -> vector<8x128xf32>
    %c0_3 = arith.constant 0 : index
    %c0_4 = arith.constant 0 : index
    %3 = vector.load %arg3[%c0_3, %c0_4] : memref<1x128xf32, #tpu.memory_space<vmem>>, vector<1x128xf32>
    %4 = vector.broadcast %3 : vector<1x128xf32> to vector<8x128xf32>
    %5 = arith.addf %2, %4 : vector<8x128xf32>
    %cst_5 = arith.constant 0.000000e+00 : f32
    %6 = vector.broadcast %cst_5 : f32 to vector<8x128xf32>
    %7 = arith.maximumf %5, %6 : vector<8x128xf32>
    %c0_6 = arith.constant 0 : index
    %c0_7 = arith.constant 0 : index
    %8 = vector.load %arg4[%c0_6, %c0_7] : memref<128x128xf32, #tpu.memory_space<vmem>>, vector<128x128xf32>
    %cst_8 = arith.constant dense<0.000000e+00> : vector<8x128xf32>
    %9 = tpu.matmul %7, %8, %cst_8 {dimension_numbers = #tpu.dot_dimension_numbers<[1], [0], [0], [1], [0, 0, 1, 1], [], []>} : vector<8x128xf32>, vector<128x128xf32>, vector<8x128xf32> -> vector<8x128xf32>
    %c0_9 = arith.constant 0 : index
    %c0_10 = arith.constant 0 : index
    %10 = vector.load %arg5[%c0_9, %c0_10] : memref<1x128xf32, #tpu.memory_space<vmem>>, vector<1x128xf32>
    %11 = vector.broadcast %10 : vector<1x128xf32> to vector<8x128xf32>
    %12 = arith.addf %9, %11 : vector<8x128xf32>
    %c0_11 = arith.constant 0 : index
    %c0_12 = arith.constant 0 : index
    %13 = vector.load %arg6[%c0_11, %c0_12] : memref<8x128xf32, #tpu.memory_space<vmem>>, vector<8x128xf32>
    tpu.vector_store %arg6[%c0_11, %c0_12], %12 {strides = array<i32>} : memref<8x128xf32, #tpu.memory_space<vmem>>, vector<8x128xf32>,
    %14 = tpu.iota {dimensions = array<i32: 1>} : vector<8x128xi32>
    %cst_13 = arith.constant dense<0xFF800000> : vector<8xf32>
    %15 = vector.multi_reduction <maximumf>, %12, %cst_13 [1] : vector<8x128xf32> to vector<8xf32>
    %16 = vector.shape_cast %15 : vector<8xf32> to vector<8x1xf32>
    %17 = vector.broadcast %16 : vector<8x1xf32> to vector<8x128xf32>
    %18 = arith.cmpf oeq, %12, %17 : vector<8x128xf32>
    %c128_i32 = arith.constant 128 : i32
    %19 = vector.broadcast %c128_i32 : i32 to vector<8x128xi32>
    %20 = arith.select %18, %14, %19 : vector<8x128xi1>, vector<8x128xi32>
    %cst_14 = arith.constant dense<2147483647> : vector<8xi32>
    %21 = vector.multi_reduction <minsi>, %20, %cst_14 [1] : vector<8x128xi32> to vector<8xi32>
    %22 = vector.shape_cast %21 : vector<8xi32> to vector<8x1xi32>
    %c0_15 = arith.constant 0 : index
    %c0_16 = arith.constant 0 : index
    %23 = vector.load %arg7[%c0_15, %c0_16] : memref<8x1xi32, #tpu.memory_space<vmem>>, vector<8x1xi32>
    tpu.vector_store %arg7[%c0_15, %c0_16], %22 {strides = array<i32>} : memref<8x1xi32, #tpu.memory_space<vmem>>, vector<8x1xi32>,
    return
  }
  func.func @transform_0(%arg0: i32) -> (i32, i32) {
    %c0_i32 = arith.constant 0 : i32
    %c0_i32_0 = arith.constant 0 : i32
    return %arg0, %c0_i32 : i32, i32
  }
  func.func @transform_1(%arg0: i32) -> (i32, i32) {
    %c0_i32 = arith.constant 0 : i32
    %c0_i32_0 = arith.constant 0 : i32
    %c0_i32_1 = arith.constant 0 : i32
    return %c0_i32, %c0_i32_0 : i32, i32
  }
  func.func @transform_2(%arg0: i32) -> (i32, i32) {
    %c0_i32 = arith.constant 0 : i32
    %c0_i32_0 = arith.constant 0 : i32
    %c0_i32_1 = arith.constant 0 : i32
    return %c0_i32, %c0_i32_0 : i32, i32
  }
  func.func @transform_3(%arg0: i32) -> (i32, i32) {
    %c0_i32 = arith.constant 0 : i32
    %c0_i32_0 = arith.constant 0 : i32
    %c0_i32_1 = arith.constant 0 : i32
    return %c0_i32, %c0_i32_0 : i32, i32
  }
  func.func @transform_4(%arg0: i32) -> (i32, i32) {
    %c0_i32 = arith.constant 0 : i32
    %c0_i32_0 = arith.constant 0 : i32
    %c0_i32_1 = arith.constant 0 : i32
    return %c0_i32, %c0_i32_0 : i32, i32
  }
  func.func @transform_5(%arg0: i32) -> (i32, i32) {
    %c0_i32 = arith.constant 0 : i32
    %c0_i32_0 = arith.constant 0 : i32
    return %arg0, %c0_i32 : i32, i32
  }
  func.func @transform_6(%arg0: i32) -> (i32, i32) {
    %c0_i32 = arith.constant 0 : i32
    %c0_i32_0 = arith.constant 0 : i32
    return %arg0, %c0_i32 : i32, i32
  }
}

</mosaic_0001>

<llo_original>
// kernel: tpu_custom_call.1
$region0: #{tpu_custom_call.1}
  #allocation0 [shape = 'u32[]', space=smem, size = 0x4, offset = 0x4, fixed_abs, tag = 'smem constant byte address 0x4 - core index']
  #allocation1 [shape = 'u32[72,128]{1,0:T(1,128)}', space=vmem, size = 0x9000, scoped, tag = 'internal scratch']
  %s0 = inlined_call_operand.hbm [shape: f32[8,128], index: 0, kind: input, shape index: {}]
  %s1 = inlined_call_operand.hbm [shape: f32[128,128], index: 1, kind: input, shape index: {}]
  %s2 = inlined_call_operand.vmem [shape: f32[1,128], index: 2, kind: input, shape index: {}]
  %s3 = inlined_call_operand.hbm [shape: f32[128,128], index: 3, kind: input, shape index: {}]
  %s4 = inlined_call_operand.vmem [shape: f32[1,128], index: 4, kind: input, shape index: {}]
  %s5 = inlined_call_operand.hbm [shape: f32[8,128], index: 5, kind: output, shape index: {0}]
  %s6 = inlined_call_operand.vmem [shape: s32[8,1], index: 6, kind: output, shape index: {1}]
  %7 = xla_tuple %s5, %s6
  %s8 = sld [smem:[#allocation0]]
  $region50: #{tpu_custom_call.1} parent=0
    _
  %s10 = ssub.s32 1, %s8
  %s11 = scalar_select 0, %s10, %s8
  $region1: #{tpu_custom_call.1} parent=0
    #allocation2 [shape = 'u8[4096]{0}', space=vmem, size = 0x1000, scoped, tag = 'input window, operand 0, single buffered']
    #allocation3 [shape = 's32[1]{0}', space=sflag, size = 0x4, scoped, tag = 'scoped memory for tpu_custom_call.1']
    #allocation4 [shape = 's32[1]{0}', space=sflag, size = 0x4, scoped, tag = 'scoped memory for tpu_custom_call.1']
    #allocation5 [shape = 'u8[65536]{0}', space=vmem, size = 0x10000, scoped, tag = 'input window, operand 1, single buffered']
    #allocation6 [shape = 's32[1]{0}', space=sflag, size = 0x4, scoped, tag = 'scoped memory for tpu_custom_call.1']
    #allocation7 [shape = 'u8[65536]{0}', space=vmem, size = 0x10000, scoped, tag = 'input window, operand 3, single buffered']
    #allocation8 [shape = 'u8[4096]{0}', space=vmem, size = 0x1000, scoped, tag = 'output window, operand 0, single buffered']
    %12 = vsyncpa [#allocation3], 0
    %13 = vsyncpa [#allocation6], 0
    %14 = vsyncpa [#allocation4], 0
    // Predicated region
    $region2: #{tpu_custom_call.1} parent=1 // pred_check
      _
    $region3: #{tpu_custom_call.1} parent=1 // pred_check_branch
      %16 = sbr.rel (0) target = $region5
    $region4: #{tpu_custom_call.1} parent=1 // pred_region
      %18 = vsyncadd [#allocation3], 0
      %s20 = sshll.u32 %s0, 4
      %s21 = int_to_ptr.hbm [resolvable:$true] %s20
      %s22 = sshll.u32 [#allocation2], 4
      %s23 = int_to_ptr.vmem [resolvable:$true] %s22
      %25 = dma.hbm_to_vmem [thread:$0]  %s21, 128, %s23, [#allocation3]
    $region5: #{tpu_custom_call.1} parent=1 // pred_fallthru
      _
    // Predicated region
    $region6: #{tpu_custom_call.1} parent=1 // pred_check
      _
    $region7: #{tpu_custom_call.1} parent=1 // pred_check_branch
      %27 = sbr.rel (0) target = $region9
    $region8: #{tpu_custom_call.1} parent=1 // pred_region
      %29 = vsyncadd [#allocation6], 0
      %s30 = sshll.u32 %s1, 4
      %s31 = int_to_ptr.hbm [resolvable:$true] %s30
      %s32 = sshll.u32 [#allocation5], 4
      %s33 = int_to_ptr.vmem [resolvable:$true] %s32
      %38 = dma.hbm_to_vmem [thread:$0]  %s31, 2048, %s33, [#allocation6], 128, 128, 8
    $region9: #{tpu_custom_call.1} parent=1 // pred_fallthru
      _
    // Predicated region
    $region10: #{tpu_custom_call.1} parent=1 // pred_check
      _
    $region11: #{tpu_custom_call.1} parent=1 // pred_check_branch
      %40 = sbr.rel (0) target = $region13
    $region12: #{tpu_custom_call.1} parent=1 // pred_region
      _
    $region13: #{tpu_custom_call.1} parent=1 // pred_fallthru
      _
    // Predicated region
    $region14: #{tpu_custom_call.1} parent=1 // pred_check
      _
    $region15: #{tpu_custom_call.1} parent=1 // pred_check_branch
      %42 = sbr.rel (0) target = $region17
    $region16: #{tpu_custom_call.1} parent=1 // pred_region
      %44 = vsyncadd [#allocation6], 0
      %s45 = sshll.u32 %s3, 4
      %s46 = int_to_ptr.hbm [resolvable:$true] %s45
      %s47 = sshll.u32 [#allocation7], 4
      %s48 = int_to_ptr.vmem [resolvable:$true] %s47
      %53 = dma.hbm_to_vmem [thread:$0]  %s46, 2048, %s48, [#allocation6], 128, 128, 8
    $region17: #{tpu_custom_call.1} parent=1 // pred_fallthru
      _
    // Predicated region
    $region18: #{tpu_custom_call.1} parent=1 // pred_check
      _
    $region19: #{tpu_custom_call.1} parent=1 // pred_check_branch
      %55 = sbr.rel (0) target = $region21
    $region20: #{tpu_custom_call.1} parent=1 // pred_region
      _
    $region21: #{tpu_custom_call.1} parent=1 // pred_fallthru
      _
    // Predicated region
    $region22: #{tpu_custom_call.1} parent=1 // pred_check
      _
    $region23: #{tpu_custom_call.1} parent=1 // pred_check_branch
      %57 = sbr.rel (0) target = $region25
    $region24: #{tpu_custom_call.1} parent=1 // pred_region
      %59 = dma.done [#allocation3], 128
    $region25: #{tpu_custom_call.1} parent=1 // pred_fallthru
      _
    // Predicated region
    $region26: #{tpu_custom_call.1} parent=1 // pred_check
      _
    $region27: #{tpu_custom_call.1} parent=1 // pred_check_branch
      %61 = sbr.rel (0) target = $region29
    $region28: #{tpu_custom_call.1} parent=1 // pred_region
      %63 = dma.done [#allocation6], 2048
    $region29: #{tpu_custom_call.1} parent=1 // pred_fallthru
      _
    // Predicated region
    $region30: #{tpu_custom_call.1} parent=1 // pred_check
      _
    $region31: #{tpu_custom_call.1} parent=1 // pred_check_branch
      %65 = sbr.rel (0) target = $region33
    $region32: #{tpu_custom_call.1} parent=1 // pred_region
      %67 = dma.done [#allocation6], 2048
    $region33: #{tpu_custom_call.1} parent=1 // pred_fallthru
      _
    %v68 = vld [vmem:[#allocation2] sm:$0xff]
    %v69 = vld [vmem:[#allocation5] sm:$0xff]
    %v70 = vld [vmem:[#allocation5 + $0x8] sm:$0xff]
    %v71 = vld [vmem:[#allocation5 + $0x10] sm:$0xff]
    %v72 = vld [vmem:[#allocation5 + $0x18] sm:$0xff]
    %v73 = vld [vmem:[#allocation5 + $0x20] sm:$0xff]
    %v74 = vld [vmem:[#allocation5 + $0x28] sm:$0xff]
    %v75 = vld [vmem:[#allocation5 + $0x30] sm:$0xff]
    %v76 = vld [vmem:[#allocation5 + $0x38] sm:$0xff]
    %v77 = vld [vmem:[#allocation5 + $0x40] sm:$0xff]
    %v78 = vld [vmem:[#allocation5 + $0x48] sm:$0xff]
    %v79 = vld [vmem:[#allocation5 + $0x50] sm:$0xff]
    %v80 = vld [vmem:[#allocation5 + $0x58] sm:$0xff]
    %v81 = vld [vmem:[#allocation5 + $0x60] sm:$0xff]
    %v82 = vld [vmem:[#allocation5 + $0x68] sm:$0xff]
    %v83 = vld [vmem:[#allocation5 + $0x70] sm:$0xff]
    %v84 = vld [vmem:[#allocation5 + $0x78] sm:$0xff]
    %v85 = vld [vmem:[%s2] sm:$0x1]
    %v87 = vperm.slane %v85, 0
    %89 = vmatpush.msra.mxu0 %v84
    %90 = vmatpush.msra.mxu0 %v83
    %91 = vmatpush.msra.mxu0 %v82
    %92 = vmatpush.msra.mxu0 %v81
    %93 = vmatpush.msra.mxu0 %v80
    %94 = vmatpush.msra.mxu0 %v79
    %95 = vmatpush.msra.mxu0 %v78
    %96 = vmatpush.msra.mxu0 %v77
    %97 = vmatpush.msra.mxu0 %v76
    %98 = vmatpush.msra.mxu0 %v75
    %99 = vmatpush.msra.mxu0 %v74
    %100 = vmatpush.msra.mxu0 %v73
    %101 = vmatpush.msra.mxu0 %v72
    %102 = vmatpush.msra.mxu0 %v71
    %103 = vmatpush.msra.mxu0 %v70
    %104 = vmatpush.msra.mxu0 %v69
    %105 = vmatmul.f32.gmra.mxu0 %v68
    %v106 = vpop.f32.mrf.mxu0
    %v107 = vadd.f32 %v87, %v106
    %108 = vdwg.mxu0
    %v109 = vmax.f32 %v107, 0.0
    %v110 = vld [vmem:[#allocation7] sm:$0xff]
    %v111 = vld [vmem:[#allocation7 + $0x8] sm:$0xff]
    %v112 = vld [vmem:[#allocation7 + $0x10] sm:$0xff]
    %v113 = vld [vmem:[#allocation7 + $0x18] sm:$0xff]
    %v114 = vld [vmem:[#allocation7 + $0x20] sm:$0xff]
    %v115 = vld [vmem:[#allocation7 + $0x28] sm:$0xff]
    %v116 = vld [vmem:[#allocation7 + $0x30] sm:$0xff]
    %v117 = vld [vmem:[#allocation7 + $0x38] sm:$0xff]
    %v118 = vld [vmem:[#allocation7 + $0x40] sm:$0xff]
    %v119 = vld [vmem:[#allocation7 + $0x48] sm:$0xff]
    %v120 = vld [vmem:[#allocation7 + $0x50] sm:$0xff]
    %v121 = vld [vmem:[#allocation7 + $0x58] sm:$0xff]
    %v122 = vld [vmem:[#allocation7 + $0x60] sm:$0xff]
    %v123 = vld [vmem:[#allocation7 + $0x68] sm:$0xff]
    %v124 = vld [vmem:[#allocation7 + $0x70] sm:$0xff]
    %v125 = vld [vmem:[#allocation7 + $0x78] sm:$0xff]
    %v126 = vld [vmem:[%s4] sm:$0x1]
    %v128 = vperm.slane %v126, 0
    %130 = vmatpush.msra.mxu0 %v125
    %131 = vmatpush.msra.mxu0 %v124
    %132 = vmatpush.msra.mxu0 %v123
    %133 = vmatpush.msra.mxu0 %v122
    %134 = vmatpush.msra.mxu0 %v121
    %135 = vmatpush.msra.mxu0 %v120
    %136 = vmatpush.msra.mxu0 %v119
    %137 = vmatpush.msra.mxu0 %v118
    %138 = vmatpush.msra.mxu0 %v117
    %139 = vmatpush.msra.mxu0 %v116
    %140 = vmatpush.msra.mxu0 %v115
    %141 = vmatpush.msra.mxu0 %v114
    %142 = vmatpush.msra.mxu0 %v113
    %143 = vmatpush.msra.mxu0 %v112
    %144 = vmatpush.msra.mxu0 %v111
    %145 = vmatpush.msra.mxu0 %v110
    %146 = vmatmul.f32.gmra.mxu0 %v109
    %v147 = vpop.f32.mrf.mxu0
    %v148 = vadd.f32 %v128, %v147
    %149 = vdwg.mxu0
    %150 = vst [vmem:[#allocation8] sm:$0xff] %v148
    %v151 = vlaneseq
    %v152 = vand.u32 %v151, 127
    %153 = vmax.xlane.f32.xlu0 %v148
    %v154 = vpop.xlane.xlu0 %153
    %vm155 = vcmp.eq.f32.partialorder %v148, %v154
    %v156 = vsel %vm155, %v152, 128
    %v157 = vand.u32 %v156, 65535
    %v158 = vshra.s32 %v156, 16
    %v159 = vcvt.s32.f32 %v157
    %v160 = vcvt.s32.f32 %v158
    %161 = vmin.xlane.f32.xlu0 %v160
    %v162 = vpop.xlane.xlu0 %161
    %vm163 = vcmp.eq.f32.partialorder %v160, %v162
    %v164 = vsel %vm163, %v159, inf
    %165 = vmin.xlane.f32.xlu0 %v164
    %v166 = vpop.xlane.xlu0 %165
    %v167 = vcvt.f32.s32 %v166
    %v168 = vcvt.f32.s32 %v162
    %v169 = vshll.u32 %v168, 16
    %v170 = vadd.s32 %v169, %v167
    %vm171 = vcmask 7168
    %172 = vst.msk [vmem:[%s6] sm:$0xff] %vm171, %v170
    // Predicated region
    $region34: #{tpu_custom_call.1} parent=1 // pred_check
      _
    $region35: #{tpu_custom_call.1} parent=1 // pred_check_branch
      %174 = sbr.rel (0) target = $region37
    $region36: #{tpu_custom_call.1} parent=1 // pred_region
      %176 = vsyncadd [#allocation4], 0
      %s178 = sshll.u32 [#allocation8], 4
      %s179 = int_to_ptr.vmem [resolvable:$true] %s178
      %s180 = sshll.u32 %s5, 4
      %s181 = int_to_ptr.hbm [resolvable:$true] %s180
      %183 = dma.vmem_to_hbm [thread:$0]  %s179, 128, %s181, [#allocation4]
    $region37: #{tpu_custom_call.1} parent=1 // pred_fallthru
      _
    // Predicated region
    $region38: #{tpu_custom_call.1} parent=1 // pred_check
      _
    $region39: #{tpu_custom_call.1} parent=1 // pred_check_branch
      %185 = sbr.rel (0) target = $region41
    $region40: #{tpu_custom_call.1} parent=1 // pred_region
      _
    $region41: #{tpu_custom_call.1} parent=1 // pred_fallthru
      _
    // Predicated region
    $region42: #{tpu_custom_call.1} parent=1 // pred_check
      _
    $region43: #{tpu_custom_call.1} parent=1 // pred_check_branch
      %187 = sbr.rel (0) target = $region45
    $region44: #{tpu_custom_call.1} parent=1 // pred_region
      %189 = dma.done [#allocation4], 128
    $region45: #{tpu_custom_call.1} parent=1 // pred_fallthru
      _
    // Predicated region
    $region46: #{tpu_custom_call.1} parent=1 // pred_check
      _
    $region47: #{tpu_custom_call.1} parent=1 // pred_check_branch
      %191 = sbr.rel (0) target = $region49
    $region48: #{tpu_custom_call.1} parent=1 // pred_region
      _
    $region49: #{tpu_custom_call.1} parent=1 // pred_fallthru
      _
    %192 = vsyncpa [#allocation3], 1
    %193 = vsyncpa [#allocation6], 1
    %194 = vsyncpa [#allocation4], 1

</llo_original>
